<compile_context>
chip_gen: v7x
topology: tpu7x:2x2x1
jax: 0.10.0
libtpu: 0.0.40
codegen_flags: <defaults>
</compile_context>

<pallas_src>
from functools import partial

import jax
import jax.numpy as jnp
from jax import lax
from jax.experimental import pallas as pl
from jax.experimental.pallas import tpu as pltpu

LANE = 128
MAX_TILE_ROWS = 2048   # 2048x128 f32 = 1 MiB per input per step (review: 2048-4096)
NUM_CORES = 2          # v7x has 2 TensorCores; harmless (sequential) on v5e/v6e


def _partial_sums_kernel(scal_ref, pred_ref, targ_ref, out_ref, *,
                         tiles_per_core, tile_rows, rows_valid, needs_mask):
    c = pl.program_id(0)   # "core" (parallel) axis
    i = pl.program_id(1)   # tile (arbitrary / reduction) axis

    @pl.when(i == 0)
    def _init():
        out_ref[...] = jnp.zeros_like(out_ref)

    median = scal_ref[0]
    window = scal_ref[1]
    inv_window = scal_ref[2]   # 0.0 when window == 0 (mask is then empty)

    p = pred_ref[...].astype(jnp.float32)
    t = targ_ref[...].astype(jnp.float32)

    def accumulate(valid):
        diff = p - t
        sq = diff * diff
        absd = jnp.abs(p - median)
        near = absd < window
        contrib = jnp.exp(-absd * inv_window)
        if valid is not None:
            sq = jnp.where(valid, sq, 0.0)
            near = jnp.logical_and(near, valid)
        contrib = jnp.where(near, contrib, 0.0)
        # Row (sublane) reduce only -> (1, 128) lane vectors accumulated into
        # the resident output block; the cross-lane reduce happens once, in glue.
        out_ref[0:1, :] += jnp.sum(sq, axis=0, keepdims=True)
        out_ref[1:2, :] += jnp.sum(contrib, axis=0, keepdims=True)
        out_ref[2:3, :] += jnp.sum(near.astype(jnp.float32), axis=0, keepdims=True)

    if needs_mask:
        row_start = (c * tiles_per_core + i) * tile_rows
        is_full = row_start + tile_rows <= rows_valid

        @pl.when(is_full)
        def _full_tile():        # fast path: no iota / selects
            accumulate(None)

        @pl.when(jnp.logical_not(is_full))
        def _partial_tile():     # ragged last tile or clamped overhang tile
            row_idx = lax.broadcasted_iota(jnp.int32, p.shape, 0)
            accumulate(row_start + row_idx < rows_valid)
    else:
        accumulate(None)


def median_balanced_mse_loss(predictions, targets, beta=0.3, window_size=0.2):
    assert predictions.shape == targets.shape
    n = int(predictions.size)
    assert n > 0

    p_flat = predictions.reshape(-1)
    t_flat = targets.reshape(-1)

    # torch.median -> lower median of the flattened tensor; min/max (-> window)
    # are free byproducts of the same sort.
    # TODO(synk): exact lower-median selection without an O(n log n) sort
    # (introselect / bucketed-count kernel) has no clean Pallas equivalent
    # here; it stays in plain-JAX glue and dominates wall-clock for huge n.
    sorted_t = jnp.sort(t_flat)
    median = sorted_t[(n - 1) // 2].astype(jnp.float32)
    window = ((sorted_t[n - 1].astype(jnp.float32) -
               sorted_t[0].astype(jnp.float32)) * jnp.float32(window_size))
    inv_window = jnp.where(window > 0.0, 1.0 / window, 0.0)  # window==0 -> empty mask
    scalars = jnp.stack([median, window, inv_window]).astype(jnp.float32)

    rows_valid = n // LANE
    tail = n - rows_valid * LANE

    if rows_valid > 0:
        # Stream the lane-aligned prefix only (no whole-array pad/copy).
        if tail:
            p2d = p_flat[:rows_valid * LANE].reshape(rows_valid, LANE)
            t2d = t_flat[:rows_valid * LANE].reshape(rows_valid, LANE)
        else:
            p2d = p_flat.reshape(rows_valid, LANE)
            t2d = t_flat.reshape(rows_valid, LANE)

        # Small inputs: one block equal to the full array (always legal).
        # Large inputs: 2048-row tiles pipelined across the grid.
        tile_rows = rows_valid if rows_valid <= MAX_TILE_ROWS else MAX_TILE_ROWS
        total_tiles = pl.cdiv(rows_valid, tile_rows)
        num_cores = NUM_CORES if total_tiles >= NUM_CORES else 1
        tiles_per_core = pl.cdiv(total_tiles, num_cores)
        needs_mask = (num_cores * tiles_per_core * tile_rows) != rows_valid
        last_tile = total_tiles - 1

        if num_cores * tiles_per_core == total_tiles:
            def data_map(c, i):
                return (c * tiles_per_core + i, 0)
        else:
            # Overhang steps re-read the last tile (clamped) and are fully
            # masked out in the kernel.
            def data_map(c, i):
                return (jnp.minimum(c * tiles_per_core + i, last_tile), 0)

        kernel = partial(_partial_sums_kernel,
                         tiles_per_core=tiles_per_core, tile_rows=tile_rows,
                         rows_valid=rows_valid, needs_mask=needs_mask)

        n_kern = rows_valid * LANE
        in_bytes = (jnp.dtype(predictions.dtype).itemsize +
                    jnp.dtype(targets.dtype).itemsize) * n_kern

        partials = pl.pallas_call(
            kernel,
            out_shape=jax.ShapeDtypeStruct((num_cores, 3, LANE), jnp.float32),
            grid=(num_cores, tiles_per_core),
            in_specs=[
                pl.BlockSpec(memory_space=pltpu.MemorySpace.SMEM),   # [median, window, 1/window]
                pl.BlockSpec((tile_rows, LANE), data_map),           # predictions tile
                pl.BlockSpec((tile_rows, LANE), data_map),           # targets tile
            ],
            out_specs=pl.BlockSpec((None, 3, LANE), lambda c, i: (c, 0, 0)),
            compiler_params=pltpu.CompilerParams(
                dimension_semantics=("parallel", "arbitrary"),
                vmem_limit_bytes=32 * 1024 * 1024),
            cost_estimate=pl.CostEstimate(
                flops=8 * n_kern,
                transcendentals=n_kern,
                bytes_accessed=in_bytes + num_cores * 3 * LANE * 4),
        )(scalars, p2d, t2d)

        sq_sum = jnp.sum(partials[:, 0, :])
        psum = jnp.sum(partials[:, 1, :])
        cnt = jnp.sum(partials[:, 2, :])
    else:
        sq_sum = jnp.float32(0.0)
        psum = jnp.float32(0.0)
        cnt = jnp.float32(0.0)

    if tail:
        # <128-element ragged lane tail finished in glue (tiny), avoiding a
        # whole-array pad through HBM.
        p_t = p_flat[rows_valid * LANE:].astype(jnp.float32)
        t_t = t_flat[rows_valid * LANE:].astype(jnp.float32)
        d = p_t - t_t
        sq_sum = sq_sum + jnp.sum(d * d)
        absd = jnp.abs(p_t - median)
        near = absd < window
        psum = psum + jnp.sum(jnp.where(near, jnp.exp(-absd * inv_window), 0.0))
        cnt = cnt + jnp.sum(near.astype(jnp.float32))

    mse = sq_sum / jnp.float32(n)
    penalty = jnp.where(cnt > 0.0, psum / jnp.maximum(cnt, 1.0), 0.0)
    return mse + jnp.float32(beta) * penalty


def _reference(predictions, targets, beta=0.3, window_size=0.2):
    p = predictions.astype(jnp.float32).reshape(-1)
    t = targets.astype(jnp.float32).reshape(-1)
    mse = jnp.mean((p - t) ** 2)
    med = jnp.sort(t)[(t.size - 1) // 2]
    window = (jnp.max(t) - jnp.min(t)) * window_size
    absd = jnp.abs(p - med)
    mask = absd < window
    contrib = jnp.where(mask, jnp.exp(-absd / window), 0.0)
    cnt = jnp.sum(mask.astype(jnp.float32))
    penalty = jnp.where(cnt > 0.0, jnp.sum(contrib) / cnt, 0.0)
    return mse + beta * penalty


if __name__ == "__main__":
    key = jax.random.PRNGKey(0)

    # Primary small NCHW shape implied by the module, plus shapes exercising
    # the ragged lane tail, the two-core split, and the masked/clamped tile
    # paths.
    shapes = [
        (2, 4, 16, 16),     # lane-aligned, single tile, single core
        (3, 5, 7, 11),      # ragged lane tail handled in glue
        (8, 16, 64, 64),    # exactly 2 tiles -> one per "core" of parallel axis
        (640050,),          # multi-tile per core + masked partial/overhang tile + lane tail
    ]
    for shp in shapes:
        key, kp, kt = jax.random.split(key, 3)
        predictions = jax.random.normal(kp, shp, dtype=jnp.float32)
        targets = jax.random.normal(kt, shp, dtype=jnp.float32)
        loss = median_balanced_mse_loss(predictions, targets)
        jax.block_until_ready(loss)
        ref = _reference(predictions, targets)
        assert jnp.allclose(loss, ref, rtol=1e-4, atol=1e-5), (shp, float(loss), float(ref))
    print("KERNEL_OK")
</pallas_src>

<mosaic_0001>
module attributes {stable_mosaic.version = 11 : i64} {
  func.func @_partial_sums_kernel(%arg0: i32, %arg1: i32, %arg2: memref<3xf32, #tpu.memory_space<smem>>, %arg3: memref<16x128xf32, #tpu.memory_space<vmem>>, %arg4: memref<16x128xf32, #tpu.memory_space<vmem>>, %arg5: memref<1x3x128xf32, #tpu.memory_space<vmem>>) attributes {dimension_semantics = [#tpu.dimension_semantics<parallel>, #tpu.dimension_semantics<arbitrary>], iteration_bounds = array<i64: 1, 1>, scalar_prefetch = 0 : i64, scratch_operands = 0 : i64, tpu.core_type = #tpu.core_type<tc>, window_params = [{transform_indices = @transform_0, window_bounds = array<i64: 3>}, {transform_indices = @transform_1, window_bounds = array<i64: 16, 128>}, {transform_indices = @transform_2, window_bounds = array<i64: 16, 128>}, {transform_indices = @transform_3, window_bounds = array<i64: 1, 3, 128>}]} {
    %c0_i32 = arith.constant 0 : i32
    %0 = arith.cmpi eq, %arg1, %c0_i32 : i32
    %1 = arith.extui %0 : i1 to i32
    %c0_i32_0 = arith.constant 0 : i32
    %2 = arith.cmpi ne, %1, %c0_i32_0 : i32
    scf.if %2 {
      %cst_27 = arith.constant 0.000000e+00 : f32
      %48 = vector.broadcast %cst_27 : f32 to vector<3x128xf32>
      %c0_28 = arith.constant 0 : index
      %c0_29 = arith.constant 0 : index
      %c0_30 = arith.constant 0 : index
      %49 = vector.load %arg5[%c0_28, %c0_29, %c0_30] : memref<1x3x128xf32, #tpu.memory_space<vmem>>, vector<1x3x128xf32>
      %50 = vector.shape_cast %49 : vector<1x3x128xf32> to vector<3x128xf32>
      %51 = vector.shape_cast %48 : vector<3x128xf32> to vector<1x3x128xf32>
      tpu.vector_store %arg5[%c0_28, %c0_29, %c0_30], %51 {strides = array<i32>} : memref<1x3x128xf32, #tpu.memory_space<vmem>>, vector<1x3x128xf32>,
    } else {
    }
    %c0 = arith.constant 0 : index
    %3 = memref.load %arg2[%c0] : memref<3xf32, #tpu.memory_space<smem>>
    %c1 = arith.constant 1 : index
    %4 = memref.load %arg2[%c1] : memref<3xf32, #tpu.memory_space<smem>>
    %c2 = arith.constant 2 : index
    %5 = memref.load %arg2[%c2] : memref<3xf32, #tpu.memory_space<smem>>
    %c0_1 = arith.constant 0 : index
    %c0_2 = arith.constant 0 : index
    %6 = vector.load %arg3[%c0_1, %c0_2] : memref<16x128xf32, #tpu.memory_space<vmem>>, vector<16x128xf32>
    %c0_3 = arith.constant 0 : index
    %c0_4 = arith.constant 0 : index
    %7 = vector.load %arg4[%c0_3, %c0_4] : memref<16x128xf32, #tpu.memory_space<vmem>>, vector<16x128xf32>
    %8 = arith.subf %6, %7 : vector<16x128xf32>
    %9 = arith.mulf %8, %8 : vector<16x128xf32>
    %10 = vector.broadcast %3 : f32 to vector<16x128xf32>
    %11 = arith.subf %6, %10 : vector<16x128xf32>
    %12 = math.absf %11 : vector<16x128xf32>
    %13 = vector.broadcast %4 : f32 to vector<16x128xf32>
    %14 = arith.cmpf olt, %12, %13 : vector<16x128xf32>
    %cst = arith.constant 0.000000e+00 : f32
    %15 = vector.broadcast %cst : f32 to vector<16x128xf32>
    %16 = arith.subf %15, %12 : vector<16x128xf32>
    %17 = vector.broadcast %5 : f32 to vector<16x128xf32>
    %18 = arith.mulf %16, %17 : vector<16x128xf32>
    %19 = math.exp %18 : vector<16x128xf32>
    %cst_5 = arith.constant 0.000000e+00 : f32
    %20 = vector.broadcast %cst_5 : f32 to vector<16x128xf32>
    %21 = arith.select %14, %19, %20 : vector<16x128xi1>, vector<16x128xf32>
    %c0_6 = arith.constant 0 : index
    %c0_7 = arith.constant 0 : index
    %c0_8 = arith.constant 0 : index
    %22 = vector.load %arg5[%c0_6, %c0_7, %c0_8] : memref<1x3x128xf32, #tpu.memory_space<vmem>>, vector<1x1x128xf32>
    %23 = vector.shape_cast %22 : vector<1x1x128xf32> to vector<1x128xf32>
    %cst_9 = arith.constant dense<0.000000e+00> : vector<128xf32>
    %24 = vector.multi_reduction <add>, %9, %cst_9 [0] : vector<16x128xf32> to vector<128xf32>
    %25 = vector.shape_cast %24 : vector<128xf32> to vector<1x128xf32>
    %26 = arith.addf %23, %25 : vector<1x128xf32>
    %c0_10 = arith.constant 0 : index
    %c0_11 = arith.constant 0 : index
    %c0_12 = arith.constant 0 : index
    %27 = vector.load %arg5[%c0_10, %c0_11, %c0_12] : memref<1x3x128xf32, #tpu.memory_space<vmem>>, vector<1x1x128xf32>
    %28 = vector.shape_cast %27 : vector<1x1x128xf32> to vector<1x128xf32>
    %29 = vector.shape_cast %26 : vector<1x128xf32> to vector<1x1x128xf32>
    tpu.vector_store %arg5[%c0_10, %c0_11, %c0_12], %29 {strides = array<i32>} : memref<1x3x128xf32, #tpu.memory_space<vmem>>, vector<1x1x128xf32>,
    %c0_13 = arith.constant 0 : index
    %c1_14 = arith.constant 1 : index
    %c0_15 = arith.constant 0 : index
    %30 = vector.load %arg5[%c0_13, %c1_14, %c0_15] : memref<1x3x128xf32, #tpu.memory_space<vmem>>, vector<1x1x128xf32>
    %31 = vector.shape_cast %30 : vector<1x1x128xf32> to vector<1x128xf32>
    %cst_16 = arith.constant dense<0.000000e+00> : vector<128xf32>
    %32 = vector.multi_reduction <add>, %21, %cst_16 [0] : vector<16x128xf32> to vector<128xf32>
    %33 = vector.shape_cast %32 : vector<128xf32> to vector<1x128xf32>
    %34 = arith.addf %31, %33 : vector<1x128xf32>
    %c0_17 = arith.constant 0 : index
    %c1_18 = arith.constant 1 : index
    %c0_19 = arith.constant 0 : index
    %35 = vector.load %arg5[%c0_17, %c1_18, %c0_19] : memref<1x3x128xf32, #tpu.memory_space<vmem>>, vector<1x1x128xf32>
    %36 = vector.shape_cast %35 : vector<1x1x128xf32> to vector<1x128xf32>
    %37 = vector.shape_cast %34 : vector<1x128xf32> to vector<1x1x128xf32>
    tpu.vector_store %arg5[%c0_17, %c1_18, %c0_19], %37 {strides = array<i32>} : memref<1x3x128xf32, #tpu.memory_space<vmem>>, vector<1x1x128xf32>,
    %c0_20 = arith.constant 0 : index
    %c2_21 = arith.constant 2 : index
    %c0_22 = arith.constant 0 : index
    %38 = vector.load %arg5[%c0_20, %c2_21, %c0_22] : memref<1x3x128xf32, #tpu.memory_space<vmem>>, vector<1x1x128xf32>
    %39 = vector.shape_cast %38 : vector<1x1x128xf32> to vector<1x128xf32>
    %40 = arith.extui %14 : vector<16x128xi1> to vector<16x128xi32>
    %41 = arith.sitofp %40 : vector<16x128xi32> to vector<16x128xf32>
    %cst_23 = arith.constant dense<0.000000e+00> : vector<128xf32>
    %42 = vector.multi_reduction <add>, %41, %cst_23 [0] : vector<16x128xf32> to vector<128xf32>
    %43 = vector.shape_cast %42 : vector<128xf32> to vector<1x128xf32>
    %44 = arith.addf %39, %43 : vector<1x128xf32>
    %c0_24 = arith.constant 0 : index
    %c2_25 = arith.constant 2 : index
    %c0_26 = arith.constant 0 : index
    %45 = vector.load %arg5[%c0_24, %c2_25, %c0_26] : memref<1x3x128xf32, #tpu.memory_space<vmem>>, vector<1x1x128xf32>
    %46 = vector.shape_cast %45 : vector<1x1x128xf32> to vector<1x128xf32>
    %47 = vector.shape_cast %44 : vector<1x128xf32> to vector<1x1x128xf32>
    tpu.vector_store %arg5[%c0_24, %c2_25, %c0_26], %47 {strides = array<i32>} : memref<1x3x128xf32, #tpu.memory_space<vmem>>, vector<1x1x128xf32>,
    return
  }
  func.func @transform_0(%arg0: i32, %arg1: i32) -> i32 {
    %c0_i32 = arith.constant 0 : i32
    %c0_i32_0 = arith.constant 0 : i32
    return %c0_i32 : i32
  }
  func.func @transform_1(%arg0: i32, %arg1: i32) -> (i32, i32) {
    %c1_i32 = arith.constant 1 : i32
    %0 = arith.muli %arg0, %c1_i32 : i32
    %1 = arith.addi %0, %arg1 : i32
    %c0_i32 = arith.constant 0 : i32
    %c0_i32_0 = arith.constant 0 : i32
    return %1, %c0_i32 : i32, i32
  }
  func.func @transform_2(%arg0: i32, %arg1: i32) -> (i32, i32) {
    %c1_i32 = arith.constant 1 : i32
    %0 = arith.muli %arg0, %c1_i32 : i32
    %1 = arith.addi %0, %arg1 : i32
    %c0_i32 = arith.constant 0 : i32
    %c0_i32_0 = arith.constant 0 : i32
    return %1, %c0_i32 : i32, i32
  }
  func.func @transform_3(%arg0: i32, %arg1: i32) -> (i32, i32, i32) {
    %c0_i32 = arith.constant 0 : i32
    %c0_i32_0 = arith.constant 0 : i32
    %c0_i32_1 = arith.constant 0 : i32
    return %arg0, %c0_i32, %c0_i32_0 : i32, i32, i32
  }
}

</mosaic_0001>

<llo_original>
// kernel: tpu_custom_call.1
$region0: #{tpu_custom_call.1}
  #allocation0 [shape = 'u32[]', space=smem, size = 0x4, offset = 0x4, fixed_abs, tag = 'smem constant byte address 0x4 - core index']
  #allocation1 [shape = 'u32[144,128]{1,0:T(1,128)}', space=vmem, size = 0x12000, scoped, tag = 'internal scratch']
  %s0 = inlined_call_operand.hbm [shape: f32[3], index: 0, kind: input, shape index: {}]
  %s1 = inlined_call_operand.hbm [shape: f32[16,128], index: 1, kind: input, shape index: {}]
  %s2 = inlined_call_operand.hbm [shape: f32[16,128], index: 2, kind: input, shape index: {}]
  %s3 = inlined_call_operand.vmem [shape: f32[1,3,128], index: 3, kind: output, shape index: {}]
  %s4 = sld [smem:[#allocation0]]
  $region38: #{tpu_custom_call.1} parent=0
    _
  %s6 = ssub.s32 1, %s4
  %s7 = scalar_select 0, %s6, %s4
  $region1: #{tpu_custom_call.1} parent=0
    #allocation2 [shape = 'u8[512]{0}', space=smem, size = 0x200, scoped, tag = 'input window, operand 0, single buffered']
    #allocation3 [shape = 's32[1]{0}', space=sflag, size = 0x4, scoped, tag = 'scoped memory for tpu_custom_call.1']
    #allocation4 [shape = 's32[1]{0}', space=sflag, size = 0x4, scoped, tag = 'scoped memory for tpu_custom_call.1']
    #allocation5 [shape = 'u8[8192]{0}', space=vmem, size = 0x2000, scoped, tag = 'input window, operand 1, single buffered']
    #allocation6 [shape = 'u8[8192]{0}', space=vmem, size = 0x2000, scoped, tag = 'input window, operand 2, single buffered']
    #allocation7 [shape = 's32[1]{0}', space=sflag, size = 0x4, scoped, tag = 'scoped memory for tpu_custom_call.1']
    %8 = vsyncpa [#allocation4], 0
    %9 = vsyncpa [#allocation3], 0
    %10 = vsyncpa [#allocation7], 0
    // Predicated region
    $region2: #{tpu_custom_call.1} parent=1 // pred_check
      _
    $region3: #{tpu_custom_call.1} parent=1 // pred_check_branch
      %12 = sbr.rel (0) target = $region5
    $region4: #{tpu_custom_call.1} parent=1 // pred_region
      %s14 = ssub.s32 16, 16
      %15 = vsyncadd [#allocation4], %s14
      %18 = dma.hbm_to_smem %s0, 16, [#allocation2], [#allocation4]
    $region5: #{tpu_custom_call.1} parent=1 // pred_fallthru
      _
    // Predicated region
    $region6: #{tpu_custom_call.1} parent=1 // pred_check
      _
    $region7: #{tpu_custom_call.1} parent=1 // pred_check_branch
      %20 = sbr.rel (0) target = $region9
    $region8: #{tpu_custom_call.1} parent=1 // pred_region
      %s21 = sadd.s32 0, 0
      %s22 = smul.u32 2, %s21
      %s24 = ssub.s32 256, 256
      %25 = vsyncadd [#allocation3], %s24
      %s26 = smul.addr %s22, 128
      %s27 = scalar_lea.hbm %s1, %s26
      %s28 = sshll.u32 [#allocation5], 4
      %s29 = int_to_ptr.vmem [resolvable:$true] %s28
      %34 = dma.hbm_to_vmem [thread:$0]  %s27, 256, %s29, [#allocation3], 128, 128, 8
    $region9: #{tpu_custom_call.1} parent=1 // pred_fallthru
      _
    // Predicated region
    $region10: #{tpu_custom_call.1} parent=1 // pred_check
      _
    $region11: #{tpu_custom_call.1} parent=1 // pred_check_branch
      %36 = sbr.rel (0) target = $region13
    $region12: #{tpu_custom_call.1} parent=1 // pred_region
      %s37 = sadd.s32 0, 0
      %s38 = smul.u32 2, %s37
      %s40 = ssub.s32 256, 256
      %41 = vsyncadd [#allocation7], %s40
      %s42 = smul.addr %s38, 128
      %s43 = scalar_lea.hbm %s2, %s42
      %s44 = sshll.u32 [#allocation6], 4
      %s45 = int_to_ptr.vmem [resolvable:$true] %s44
      %50 = dma.hbm_to_vmem [thread:$0]  %s43, 256, %s45, [#allocation7], 128, 128, 8
    $region13: #{tpu_custom_call.1} parent=1 // pred_fallthru
      _
    // Predicated region
    $region14: #{tpu_custom_call.1} parent=1 // pred_check
      _
    $region15: #{tpu_custom_call.1} parent=1 // pred_check_branch
      %52 = sbr.rel (0) target = $region17
    $region16: #{tpu_custom_call.1} parent=1 // pred_region
      %53 = dma.done [#allocation4], 16
    $region17: #{tpu_custom_call.1} parent=1 // pred_fallthru
      _
    // Predicated region
    $region18: #{tpu_custom_call.1} parent=1 // pred_check
      _
    $region19: #{tpu_custom_call.1} parent=1 // pred_check_branch
      %55 = sbr.rel (0) target = $region21
    $region20: #{tpu_custom_call.1} parent=1 // pred_region
      %56 = dma.done [#allocation3], 256
    $region21: #{tpu_custom_call.1} parent=1 // pred_fallthru
      _
    // Predicated region
    $region22: #{tpu_custom_call.1} parent=1 // pred_check
      _
    $region23: #{tpu_custom_call.1} parent=1 // pred_check_branch
      %58 = sbr.rel (0) target = $region25
    $region24: #{tpu_custom_call.1} parent=1 // pred_region
      %59 = dma.done [#allocation7], 256
    $region25: #{tpu_custom_call.1} parent=1 // pred_fallthru
      _
    %60 = sfence
    %s61 = sadd.s32 0, 0
    %s62 = smul.u32 2, %s61
    %s63 = sadd.s32 0, 0
    %s64 = smul.u32 2, %s63
    %p65 = scmp.eq.s32.totalorder 0, 0
    // Predicated region
    $region26: #{tpu_custom_call.1} parent=1 // pred_check
      %p66 = pneg %p65
    $region27: #{tpu_custom_call.1} parent=1 // pred_check_branch
      %68 = sbr.rel (%p66) target = $region29
    $region28: #{tpu_custom_call.1} parent=1 // pred_region
      %69 = vst [vmem:[%s3] sm:$0x7] 0.0
    $region29: #{tpu_custom_call.1} parent=1 // pred_fallthru
      _
    %s70 = sld [smem:[#allocation2]]
    %s71 = sld [smem:[#allocation2 + $0x1]]
    %s72 = sld [smem:[#allocation2 + $0x2]]
    %v73 = vld [vmem:[#allocation5] sm:$0xff]
    %v74 = vld [vmem:[#allocation5 + $0x8] sm:$0xff]
    %v75 = vld [vmem:[#allocation6] sm:$0xff]
    %v76 = vld [vmem:[#allocation6 + $0x8] sm:$0xff]
    %v77 = vsub.f32 %v73, %v75
    %v78 = vsub.f32 %v74, %v76
    %v79 = vmul.f32 %v77, %v77
    %v80 = vmul.f32 %v78, %v78
    %v81 = vstv %s70
    %v82 = vsub.f32 %v73, %v81
    %v83 = vsub.f32 %v74, %v81
    %v84 = vand.u32 2147483647, %v82
    %v85 = vand.u32 2147483647, %v83
    %v86 = vstv %s71
    %vm87 = vcmp.lt.f32.partialorder %v84, %v86
    %vm88 = vcmp.lt.f32.partialorder %v85, %v86
    %v89 = vsub.f32 0.0, %v84
    %v90 = vsub.f32 0.0, %v85
    %v91 = vstv %s72
    %v92 = vmul.f32 %v89, %v91
    %v93 = vmul.f32 %v90, %v91
    %v94 = vmul.f32 %v92, 1.442695
    %v95 = vpow.pop %v94
    %v96 = vmul.f32 %v93, 1.442695
    %v97 = vpow.pop %v96
    %v98 = vsel %vm87, %v95, 0.0
    %v99 = vsel %vm88, %v97, 0.0
    %v100 = vld [vmem:[%s3] sm:$0x1]
    %v101 = vadd.f32 %v79, %v80
    %v102 = vrot.slane %v101, 4
    %v103 = vadd.f32 %v101, %v102
    %v104 = vrot.slane %v103, 2
    %v105 = vadd.f32 %v103, %v104
    %v106 = vrot.slane %v105, 1
    %v107 = vadd.f32 %v105, %v106
    %v108 = vadd.f32 %v100, %v107
    %109 = vst [vmem:[%s3] sm:$0x1] %v108
    %v110 = vld [vmem:[%s3 + $0x1] sm:$0x1]
    %v111 = vadd.f32 %v98, %v99
    %v112 = vrot.slane %v111, 4
    %v113 = vadd.f32 %v111, %v112
    %v114 = vrot.slane %v113, 2
    %v115 = vadd.f32 %v113, %v114
    %v116 = vrot.slane %v115, 1
    %v117 = vadd.f32 %v115, %v116
    %v118 = vadd.f32 %v110, %v117
    %119 = vst [vmem:[%s3 + $0x1] sm:$0x1] %v118
    %v120 = vld [vmem:[%s3 + $0x2] sm:$0x1]
    %v121 = vsel %vm87, 1, 0
    %v122 = vsel %vm88, 1, 0
    %v123 = vcvt.s32.f32 %v121
    %v124 = vcvt.s32.f32 %v122
    %v125 = vadd.f32 %v123, %v124
    %v126 = vrot.slane %v125, 4
    %v127 = vadd.f32 %v125, %v126
    %v128 = vrot.slane %v127, 2
    %v129 = vadd.f32 %v127, %v128
    %v130 = vrot.slane %v129, 1
    %v131 = vadd.f32 %v129, %v130
    %v132 = vadd.f32 %v120, %v131
    %133 = vst [vmem:[%s3 + $0x2] sm:$0x1] %v132
    // Predicated region
    $region30: #{tpu_custom_call.1} parent=1 // pred_check
      _
    $region31: #{tpu_custom_call.1} parent=1 // pred_check_branch
      %135 = sbr.rel (0) target = $region33
    $region32: #{tpu_custom_call.1} parent=1 // pred_region
      _
    $region33: #{tpu_custom_call.1} parent=1 // pred_fallthru
      _
    // Predicated region
    $region34: #{tpu_custom_call.1} parent=1 // pred_check
      _
    $region35: #{tpu_custom_call.1} parent=1 // pred_check_branch
      %137 = sbr.rel (0) target = $region37
    $region36: #{tpu_custom_call.1} parent=1 // pred_region
      _
    $region37: #{tpu_custom_call.1} parent=1 // pred_fallthru
      _
    %138 = vsyncpa [#allocation3], 1
    %139 = vsyncpa [#allocation7], 1
    %140 = vsyncpa [#allocation4], 1

</llo_original>
